<compile_context>
chip_gen: v5e
topology: v5e:2x2
jax: 0.10.0
libtpu: 0.0.40
codegen_flags: <defaults>
</compile_context>

<pallas_src>
import jax
import jax.numpy as jnp
from jax.experimental import pallas as pl
from jax.experimental.pallas import tpu as pltpu

HIDDEN = 400        # logical hidden width of the PyTorch module
HIDDEN_PAD = 512    # zero-padded to a multiple of 128 lanes


def _cdiv(a, b):
    return (a + b - 1) // b


def _round_up(x, m):
    return _cdiv(x, m) * m


def _mlp_kernel(x_ref, w1_ref, b1_ref, w2_ref, b2_ref, w3_ref, b3_ref, o_ref):
    # fc1: bf16 MXU operands, f32 accumulation; bias/ReLU in f32.
    x = x_ref[...].astype(jnp.bfloat16)                         # (TB, D) bf16
    h1 = jnp.dot(x, w1_ref[...], preferred_element_type=jnp.float32)
    h1 = jnp.maximum(h1 + b1_ref[...], 0.0)                     # (TB, 512) f32

    # fc2: cast activations to bf16 only at the dot.
    h2 = jnp.dot(h1.astype(jnp.bfloat16), w2_ref[...],
                 preferred_element_type=jnp.float32)
    h2 = jnp.maximum(h2 + b2_ref[...], 0.0)                     # (TB, 512) f32

    # fc3_mean (N=1 head) on the VPU/XLU: multiply + lane reduce in f32.
    # Padded lanes of w3 are exact zeros, so they contribute nothing.
    head = jnp.sum(h2 * w3_ref[...], axis=-1, keepdims=True)    # (TB, 1) f32
    o_ref[...] = (head + b3_ref[0, 0]).astype(o_ref.dtype)


def fcc_regression_parkinsons_mean(x, padded_params, *, tile_b=512):
    """x: (B, input_size) f32. padded_params: 512-padded weights/biases."""
    w1, b1 = padded_params["w1"], padded_params["b1"]
    w2, b2 = padded_params["w2"], padded_params["b2"]
    w3, b3 = padded_params["w3"], padded_params["b3"]

    B, D = x.shape
    HP = w1.shape[1]

    # Batch tiling: pick the smallest number of tiles, then the smallest
    # 8-aligned tile that covers B, so padded rows never exceed ~tile_b worth
    # of 8-row rounding (B=300 -> 304, not 512).
    num_tiles = _cdiv(B, tile_b)
    tb = _round_up(_cdiv(B, num_tiles), 8)
    B_pad = num_tiles * tb
    if B_pad != B:
        x = jnp.pad(x, ((0, B_pad - B), (0, 0)))

    flops = 2 * B_pad * (D * HP + HP * HP + HP)
    bytes_accessed = (
        4 * (x.size + B_pad * 1 + b1.size + b2.size + w3.size + b3.size)
        + 2 * (w1.size + w2.size)   # bf16 weights
    )

    out = pl.pallas_call(
        _mlp_kernel,
        out_shape=jax.ShapeDtypeStruct((B_pad, 1), jnp.float32),
        grid=(num_tiles,),
        in_specs=[
            pl.BlockSpec((tb, D), lambda i: (i, 0)),      # x: tiled over batch
            pl.BlockSpec((D, HP), lambda i: (0, 0)),      # w1 (bf16), resident
            pl.BlockSpec((1, HP), lambda i: (0, 0)),      # b1 (f32)
            pl.BlockSpec((HP, HP), lambda i: (0, 0)),     # w2 (bf16), resident
            pl.BlockSpec((1, HP), lambda i: (0, 0)),      # b2 (f32)
            pl.BlockSpec((1, HP), lambda i: (0, 0)),      # w3 row (f32)
            pl.BlockSpec(memory_space=pltpu.MemorySpace.SMEM),  # b3 scalar
        ],
        out_specs=pl.BlockSpec((tb, 1), lambda i: (i, 0)),
        compiler_params=pltpu.CompilerParams(
            dimension_semantics=("parallel",),
        ),
        cost_estimate=pl.CostEstimate(
            flops=flops, transcendentals=0, bytes_accessed=bytes_accessed),
    )(x, w1, b1, w2, b2, w3, b3)

    return out[:B]


def init_params(key, input_size):
    """PyTorch nn.Linear default init (uniform +-1/sqrt(fan_in)); weights
    stored transposed relative to PyTorch: (in, out). Logical (unpadded) f32."""
    ks = jax.random.split(key, 6)

    def lin(kw, kb, fan_in, fan_out):
        bound = 1.0 / jnp.sqrt(fan_in)
        w = jax.random.uniform(kw, (fan_in, fan_out), jnp.float32, -bound, bound)
        b = jax.random.uniform(kb, (1, fan_out), jnp.float32, -bound, bound)
        return w, b

    w1, b1 = lin(ks[0], ks[1], input_size, HIDDEN)
    w2, b2 = lin(ks[2], ks[3], HIDDEN, HIDDEN)
    w3, b3 = lin(ks[4], ks[5], HIDDEN, 1)
    return {"w1": w1, "b1": b1, "w2": w2, "b2": b2, "w3": w3, "b3": b3}


def pad_params(p, hidden_pad=HIDDEN_PAD):
    """Zero-pad hidden dim 400 -> 512. Matmul weights stored bf16 (halves the
    dominant weight DMA); biases and the VPU-head weight w3 stay f32."""
    pad = hidden_pad - HIDDEN
    return {
        "w1": jnp.pad(p["w1"], ((0, 0), (0, pad))).astype(jnp.bfloat16),
        "b1": jnp.pad(p["b1"], ((0, 0), (0, pad))),
        "w2": jnp.pad(p["w2"], ((0, pad), (0, pad))).astype(jnp.bfloat16),
        "b2": jnp.pad(p["b2"], ((0, 0), (0, pad))),
        "w3": jnp.pad(p["w3"].T, ((0, 0), (0, pad))),   # (1, 512) f32
        "b3": p["b3"],                                   # (1, 1) f32 -> SMEM
    }


def reference_kernel_precision(x, padded):
    """Pure-JAX reference mirroring the kernel's numerics (bf16 MXU operands,
    f32 accumulation and elementwise)."""
    f32 = jnp.float32
    w1 = padded["w1"].astype(f32)
    w2 = padded["w2"].astype(f32)
    xb = x.astype(jnp.bfloat16).astype(f32)
    h1 = jnp.maximum(xb @ w1 + padded["b1"], 0.0)
    h1 = h1.astype(jnp.bfloat16).astype(f32)
    h2 = jnp.maximum(h1 @ w2 + padded["b2"], 0.0)
    return jnp.sum(h2 * padded["w3"], axis=-1, keepdims=True) + padded["b3"]


def reference_f32(x, p):
    """Full-f32 reference of the original PyTorch forward (unpadded params)."""
    h1 = jnp.maximum(x @ p["w1"] + p["b1"], 0.0)
    h2 = jnp.maximum(h1 @ p["w2"] + p["b2"], 0.0)
    return h2 @ p["w3"] + p["b3"]


if __name__ == "__main__":
    key = jax.random.PRNGKey(0)
    k_x, k_p = jax.random.split(key)

    batch, input_size = 8, 16  # Parkinsons telemonitoring: small feature count
    x = jax.random.normal(k_x, (batch, input_size), dtype=jnp.float32)

    params = init_params(k_p, input_size)
    padded = pad_params(params)

    out = fcc_regression_parkinsons_mean(x, padded)
    out = jax.block_until_ready(out)
    assert out.shape == (batch, 1)

    # Exact-precision check (reference mirrors the kernel's bf16-operand /
    # f32-accumulation math).
    ref_k = reference_kernel_precision(x, padded)
    assert jnp.allclose(out, ref_k, atol=1e-3, rtol=1e-3), (out, ref_k)

    # Coarse check against the original full-f32 forward pass.
    ref_f = reference_f32(x, params)
    assert jnp.allclose(out, ref_f, atol=5e-2, rtol=5e-2), (out, ref_f)

    print("KERNEL_OK")
</pallas_src>

<mosaic_0001>
module attributes {stable_mosaic.version = 11 : i64} {
  func.func @_mlp_kernel(%arg0: i32, %arg1: memref<8x16xf32, #tpu.memory_space<vmem>>, %arg2: memref<16x512xbf16, #tpu.memory_space<vmem>>, %arg3: memref<1x512xf32, #tpu.memory_space<vmem>>, %arg4: memref<512x512xbf16, #tpu.memory_space<vmem>>, %arg5: memref<1x512xf32, #tpu.memory_space<vmem>>, %arg6: memref<1x512xf32, #tpu.memory_space<vmem>>, %arg7: memref<1x1xf32, #tpu.memory_space<smem>>, %arg8: memref<8x1xf32, #tpu.memory_space<vmem>>) attributes {dimension_semantics = [#tpu.dimension_semantics<parallel>], iteration_bounds = array<i64: 1>, scalar_prefetch = 0 : i64, scratch_operands = 0 : i64, tpu.core_type = #tpu.core_type<tc>, window_params = [{transform_indices = @transform_0, window_bounds = array<i64: 8, 16>}, {pipeline_mode = #tpu.pipeline_mode<synchronous>, transform_indices = @transform_1, window_bounds = array<i64: 16, 512>}, {pipeline_mode = #tpu.pipeline_mode<synchronous>, transform_indices = @transform_2, window_bounds = array<i64: 1, 512>}, {pipeline_mode = #tpu.pipeline_mode<synchronous>, transform_indices = @transform_3, window_bounds = array<i64: 512, 512>}, {pipeline_mode = #tpu.pipeline_mode<synchronous>, transform_indices = @transform_4, window_bounds = array<i64: 1, 512>}, {pipeline_mode = #tpu.pipeline_mode<synchronous>, transform_indices = @transform_5, window_bounds = array<i64: 1, 512>}, {transform_indices = @transform_6, window_bounds = array<i64: 1, 1>}, {transform_indices = @transform_7, window_bounds = array<i64: 8, 1>}]} {
    %c0 = arith.constant 0 : index
    %c0_0 = arith.constant 0 : index
    %0 = vector.load %arg1[%c0, %c0_0] : memref<8x16xf32, #tpu.memory_space<vmem>>, vector<8x16xf32>
    %1 = arith.truncf %0 : vector<8x16xf32> to vector<8x16xbf16>
    %c0_1 = arith.constant 0 : index
    %c0_2 = arith.constant 0 : index
    %2 = vector.load %arg2[%c0_1, %c0_2] : memref<16x512xbf16, #tpu.memory_space<vmem>>, vector<16x512xbf16>
    %cst = arith.constant dense<0.000000e+00> : vector<8x512xf32>
    %3 = tpu.matmul %1, %2, %cst {dimension_numbers = #tpu.dot_dimension_numbers<[1], [0], [0], [1], [0, 0, 1, 1], [], []>} : vector<8x16xbf16>, vector<16x512xbf16>, vector<8x512xf32> -> vector<8x512xf32>
    %c0_3 = arith.constant 0 : index
    %c0_4 = arith.constant 0 : index
    %4 = vector.load %arg3[%c0_3, %c0_4] : memref<1x512xf32, #tpu.memory_space<vmem>>, vector<1x512xf32>
    %5 = vector.broadcast %4 : vector<1x512xf32> to vector<8x512xf32>
    %6 = arith.addf %3, %5 : vector<8x512xf32>
    %cst_5 = arith.constant 0.000000e+00 : f32
    %7 = vector.broadcast %cst_5 : f32 to vector<8x512xf32>
    %8 = arith.maximumf %6, %7 : vector<8x512xf32>
    %9 = arith.truncf %8 : vector<8x512xf32> to vector<8x512xbf16>
    %c0_6 = arith.constant 0 : index
    %c0_7 = arith.constant 0 : index
    %10 = vector.load %arg4[%c0_6, %c0_7] : memref<512x512xbf16, #tpu.memory_space<vmem>>, vector<512x512xbf16>
    %cst_8 = arith.constant dense<0.000000e+00> : vector<8x512xf32>
    %11 = tpu.matmul %9, %10, %cst_8 {dimension_numbers = #tpu.dot_dimension_numbers<[1], [0], [0], [1], [0, 0, 1, 1], [], []>} : vector<8x512xbf16>, vector<512x512xbf16>, vector<8x512xf32> -> vector<8x512xf32>
    %c0_9 = arith.constant 0 : index
    %c0_10 = arith.constant 0 : index
    %12 = vector.load %arg5[%c0_9, %c0_10] : memref<1x512xf32, #tpu.memory_space<vmem>>, vector<1x512xf32>
    %13 = vector.broadcast %12 : vector<1x512xf32> to vector<8x512xf32>
    %14 = arith.addf %11, %13 : vector<8x512xf32>
    %cst_11 = arith.constant 0.000000e+00 : f32
    %15 = vector.broadcast %cst_11 : f32 to vector<8x512xf32>
    %16 = arith.maximumf %14, %15 : vector<8x512xf32>
    %c0_12 = arith.constant 0 : index
    %c0_13 = arith.constant 0 : index
    %17 = vector.load %arg6[%c0_12, %c0_13] : memref<1x512xf32, #tpu.memory_space<vmem>>, vector<1x512xf32>
    %18 = vector.broadcast %17 : vector<1x512xf32> to vector<8x512xf32>
    %19 = arith.mulf %16, %18 : vector<8x512xf32>
    %cst_14 = arith.constant dense<0.000000e+00> : vector<8xf32>
    %20 = vector.multi_reduction <add>, %19, %cst_14 [1] : vector<8x512xf32> to vector<8xf32>
    %21 = vector.shape_cast %20 : vector<8xf32> to vector<8x1xf32>
    %c0_15 = arith.constant 0 : index
    %c0_16 = arith.constant 0 : index
    %22 = memref.load %arg7[%c0_15, %c0_16] : memref<1x1xf32, #tpu.memory_space<smem>>
    %23 = vector.broadcast %22 : f32 to vector<8x1xf32>
    %24 = arith.addf %21, %23 : vector<8x1xf32>
    %c0_17 = arith.constant 0 : index
    %c0_18 = arith.constant 0 : index
    %25 = vector.load %arg8[%c0_17, %c0_18] : memref<8x1xf32, #tpu.memory_space<vmem>>, vector<8x1xf32>
    tpu.vector_store %arg8[%c0_17, %c0_18], %24 {strides = array<i32>} : memref<8x1xf32, #tpu.memory_space<vmem>>, vector<8x1xf32>,
    return
  }
  func.func @transform_0(%arg0: i32) -> (i32, i32) {
    %c0_i32 = arith.constant 0 : i32
    %c0_i32_0 = arith.constant 0 : i32
    return %arg0, %c0_i32 : i32, i32
  }
  func.func @transform_1(%arg0: i32) -> (i32, i32) {
    %c0_i32 = arith.constant 0 : i32
    %c0_i32_0 = arith.constant 0 : i32
    %c0_i32_1 = arith.constant 0 : i32
    return %c0_i32, %c0_i32_0 : i32, i32
  }
  func.func @transform_2(%arg0: i32) -> (i32, i32) {
    %c0_i32 = arith.constant 0 : i32
    %c0_i32_0 = arith.constant 0 : i32
    %c0_i32_1 = arith.constant 0 : i32
    return %c0_i32, %c0_i32_0 : i32, i32
  }
  func.func @transform_3(%arg0: i32) -> (i32, i32) {
    %c0_i32 = arith.constant 0 : i32
    %c0_i32_0 = arith.constant 0 : i32
    %c0_i32_1 = arith.constant 0 : i32
    return %c0_i32, %c0_i32_0 : i32, i32
  }
  func.func @transform_4(%arg0: i32) -> (i32, i32) {
    %c0_i32 = arith.constant 0 : i32
    %c0_i32_0 = arith.constant 0 : i32
    %c0_i32_1 = arith.constant 0 : i32
    return %c0_i32, %c0_i32_0 : i32, i32
  }
  func.func @transform_5(%arg0: i32) -> (i32, i32) {
    %c0_i32 = arith.constant 0 : i32
    %c0_i32_0 = arith.constant 0 : i32
    %c0_i32_1 = arith.constant 0 : i32
    return %c0_i32, %c0_i32_0 : i32, i32
  }
  func.func @transform_6(%arg0: i32) -> (i32, i32) {
    %c0_i32 = arith.constant 0 : i32
    %c0_i32_0 = arith.constant 0 : i32
    %c0_i32_1 = arith.constant 0 : i32
    return %c0_i32, %c0_i32_0 : i32, i32
  }
  func.func @transform_7(%arg0: i32) -> (i32, i32) {
    %c0_i32 = arith.constant 0 : i32
    %c0_i32_0 = arith.constant 0 : i32
    return %arg0, %c0_i32 : i32, i32
  }
}

</mosaic_0001>

<llo_original>
// kernel: tpu_custom_call.1
$region0: #{tpu_custom_call.1}
  #allocation0 [shape = 'u32[]', space=smem, size = 0x4, offset = 0x4, fixed_abs, tag = 'smem constant byte address 0x4 - core index']
  #allocation1 [shape = 'u32[72,128]{1,0:T(1,128)}', space=vmem, size = 0x9000, scoped, tag = 'internal scratch']
  #allocation2 [shape = 'f32[1,1]{1,0:T(1,128)S(6)}', space=smem, size = 0x200, scoped, tag = 'scoped memory for tpu_custom_call.1']
  %s0 = inlined_call_operand.hbm [shape: f32[8,16], index: 0, kind: input, shape index: {}]
  %s1 = inlined_call_operand.hbm [shape: bf16[16,512], index: 1, kind: input, shape index: {}]
  %s2 = inlined_call_operand.hbm [shape: f32[1,512], index: 2, kind: input, shape index: {}]
  %s3 = inlined_call_operand.hbm [shape: bf16[512,512], index: 3, kind: input, shape index: {}]
  %s4 = inlined_call_operand.vmem [shape: f32[1,512], index: 4, kind: input, shape index: {}]
  %s5 = inlined_call_operand.hbm [shape: f32[1,512], index: 5, kind: input, shape index: {}]
  %s6 = inlined_call_operand.<no memory space> [shape: f32[1,1], index: 6, kind: input, shape index: {}]
  %s7 = inlined_call_operand.vmem [shape: f32[8,1], index: 7, kind: output, shape index: {}]
  %s8 = sld [smem:[#allocation0]]
  $region58: #{tpu_custom_call.1} parent=0
    _
  %s10 = ssub.s32 1, %s8
  %s11 = scalar_select 0, %s10, %s8
  %12 = sst [smem:[#allocation2]] %s6
  $region1: #{tpu_custom_call.1} parent=0
    #allocation3 [shape = 'u8[4096]{0}', space=vmem, size = 0x1000, scoped, tag = 'input window, operand 0, single buffered']
    #allocation4 [shape = 's32[1]{0}', space=sflag, size = 0x4, scoped, tag = 'scoped memory for tpu_custom_call.1']
    #allocation5 [shape = 'u8[16384]{0}', space=vmem, size = 0x4000, scoped, tag = 'input window, operand 1, single buffered']
    #allocation6 [shape = 's32[1]{0}', space=sflag, size = 0x4, scoped, tag = 'scoped memory for tpu_custom_call.1']
    #allocation7 [shape = 'u8[2048]{0}', space=vmem, size = 0x800, scoped, tag = 'input window, operand 2, single buffered']
    #allocation8 [shape = 'u8[524288]{0}', space=vmem, size = 0x80000, scoped, tag = 'input window, operand 3, single buffered']
    #allocation9 [shape = 's32[1]{0}', space=sflag, size = 0x4, scoped, tag = 'scoped memory for tpu_custom_call.1']
    #allocation10 [shape = 'u8[2048]{0}', space=vmem, size = 0x800, scoped, tag = 'input window, operand 5, single buffered']
    %13 = vsyncpa [#allocation4], 0
    %14 = vsyncpa [#allocation6], 0
    %15 = vsyncpa [#allocation9], 0
    // Predicated region
    $region2: #{tpu_custom_call.1} parent=1 // pred_check
      _
    $region3: #{tpu_custom_call.1} parent=1 // pred_check_branch
      %17 = sbr.rel (0) target = $region5
    $region4: #{tpu_custom_call.1} parent=1 // pred_region
      %19 = vsyncadd [#allocation4], 0
      %s21 = sshll.u32 %s0, 4
      %s22 = int_to_ptr.hbm [resolvable:$true] %s21
      %s23 = sshll.u32 [#allocation3], 4
      %s24 = int_to_ptr.vmem [resolvable:$true] %s23
      %26 = dma.hbm_to_vmem [thread:$0]  %s22, 128, %s24, [#allocation4]
    $region5: #{tpu_custom_call.1} parent=1 // pred_fallthru
      _
    // Predicated region
    $region6: #{tpu_custom_call.1} parent=1 // pred_check
      _
    $region7: #{tpu_custom_call.1} parent=1 // pred_check_branch
      %28 = sbr.rel (0) target = $region9
    $region8: #{tpu_custom_call.1} parent=1 // pred_region
      %30 = vsyncadd [#allocation6], 0
      %s31 = sshll.u32 %s1, 4
      %s32 = int_to_ptr.hbm [resolvable:$true] %s31
      %s33 = sshll.u32 [#allocation5], 4
      %s34 = int_to_ptr.vmem [resolvable:$true] %s33
      %39 = dma.hbm_to_vmem [thread:$0]  %s32, 512, %s34, [#allocation6], 256, 256, 16
    $region9: #{tpu_custom_call.1} parent=1 // pred_fallthru
      _
    // Predicated region
    $region10: #{tpu_custom_call.1} parent=1 // pred_check
      _
    $region11: #{tpu_custom_call.1} parent=1 // pred_check_branch
      %41 = sbr.rel (0) target = $region13
    $region12: #{tpu_custom_call.1} parent=1 // pred_region
      %43 = vsyncadd [#allocation6], 0
      %s45 = sshll.u32 %s2, 4
      %s46 = int_to_ptr.hbm [resolvable:$true] %s45
      %s47 = sshll.u32 [#allocation7], 4
      %s48 = int_to_ptr.vmem [resolvable:$true] %s47
      %50 = dma.hbm_to_vmem [thread:$0]  %s46, 64, %s48, [#allocation6]
    $region13: #{tpu_custom_call.1} parent=1 // pred_fallthru
      _
    // Predicated region
    $region14: #{tpu_custom_call.1} parent=1 // pred_check
      _
    $region15: #{tpu_custom_call.1} parent=1 // pred_check_branch
      %52 = sbr.rel (0) target = $region17
    $region16: #{tpu_custom_call.1} parent=1 // pred_region
      %54 = vsyncadd [#allocation9], 0
      %s55 = sshll.u32 %s3, 4
      %s56 = int_to_ptr.hbm [resolvable:$true] %s55
      %s57 = sshll.u32 [#allocation8], 4
      %s58 = int_to_ptr.vmem [resolvable:$true] %s57
      %63 = dma.hbm_to_vmem [thread:$0]  %s56, 16384, %s58, [#allocation9], 256, 256, 16
    $region17: #{tpu_custom_call.1} parent=1 // pred_fallthru
      _
    // Predicated region
    $region18: #{tpu_custom_call.1} parent=1 // pred_check
      _
    $region19: #{tpu_custom_call.1} parent=1 // pred_check_branch
      %65 = sbr.rel (0) target = $region21
    $region20: #{tpu_custom_call.1} parent=1 // pred_region
      _
    $region21: #{tpu_custom_call.1} parent=1 // pred_fallthru
      _
    // Predicated region
    $region22: #{tpu_custom_call.1} parent=1 // pred_check
      _
    $region23: #{tpu_custom_call.1} parent=1 // pred_check_branch
      %67 = sbr.rel (0) target = $region25
    $region24: #{tpu_custom_call.1} parent=1 // pred_region
      %69 = vsyncadd [#allocation9], 0
      %s71 = sshll.u32 %s5, 4
      %s72 = int_to_ptr.hbm [resolvable:$true] %s71
      %s73 = sshll.u32 [#allocation10], 4
      %s74 = int_to_ptr.vmem [resolvable:$true] %s73
      %76 = dma.hbm_to_vmem [thread:$0]  %s72, 64, %s74, [#allocation9]
    $region25: #{tpu_custom_call.1} parent=1 // pred_fallthru
      _
    // Predicated region
    $region26: #{tpu_custom_call.1} parent=1 // pred_check
      _
    $region27: #{tpu_custom_call.1} parent=1 // pred_check_branch
      %78 = sbr.rel (0) target = $region29
    $region28: #{tpu_custom_call.1} parent=1 // pred_region
      _
    $region29: #{tpu_custom_call.1} parent=1 // pred_fallthru
      _
    // Predicated region
    $region30: #{tpu_custom_call.1} parent=1 // pred_check
      _
    $region31: #{tpu_custom_call.1} parent=1 // pred_check_branch
      %80 = sbr.rel (0) target = $region33
    $region32: #{tpu_custom_call.1} parent=1 // pred_region
      %82 = dma.done [#allocation4], 128
    $region33: #{tpu_custom_call.1} parent=1 // pred_fallthru
      _
    // Predicated region
    $region34: #{tpu_custom_call.1} parent=1 // pred_check
      _
    $region35: #{tpu_custom_call.1} parent=1 // pred_check_branch
      %84 = sbr.rel (0) target = $region37
    $region36: #{tpu_custom_call.1} parent=1 // pred_region
      %86 = dma.done [#allocation6], 512
    $region37: #{tpu_custom_call.1} parent=1 // pred_fallthru
      _
    // Predicated region
    $region38: #{tpu_custom_call.1} parent=1 // pred_check
      _
    $region39: #{tpu_custom_call.1} parent=1 // pred_check_branch
      %88 = sbr.rel (0) target = $region41
    $region40: #{tpu_custom_call.1} parent=1 // pred_region
      %90 = dma.done [#allocation6], 64
    $region41: #{tpu_custom_call.1} parent=1 // pred_fallthru
      _
    // Predicated region
    $region42: #{tpu_custom_call.1} parent=1 // pred_check
      _
    $region43: #{tpu_custom_call.1} parent=1 // pred_check_branch
      %92 = sbr.rel (0) target = $region45
    $region44: #{tpu_custom_call.1} parent=1 // pred_region
      %94 = dma.done [#allocation9], 16384
    $region45: #{tpu_custom_call.1} parent=1 // pred_fallthru
      _
    // Predicated region
    $region46: #{tpu_custom_call.1} parent=1 // pred_check
      _
    $region47: #{tpu_custom_call.1} parent=1 // pred_check_branch
      %96 = sbr.rel (0) target = $region49
    $region48: #{tpu_custom_call.1} parent=1 // pred_region
      %98 = dma.done [#allocation9], 64
    $region49: #{tpu_custom_call.1} parent=1 // pred_fallthru
      _
    %v100 = vld [vmem:[#allocation3] sm:$0xff]
    %v101 = vpack.c.bf16 %v100, %v100
    %v102 = vld [vmem:[#allocation5] sm:$0xff]
    %v103 = vld [vmem:[#allocation5 + $0x8] sm:$0xff]
    %v104 = vld [vmem:[#allocation5 + $0x10] sm:$0xff]
    %v105 = vld [vmem:[#allocation5 + $0x18] sm:$0xff]
    %v106 = vld [vmem:[#allocation7] sm:$0xf]
    %v108 = vperm.slane %v106, 0
    %v109 = vperm.slane %v106, 1
    %v110 = vperm.slane %v106, 2
    %v111 = vperm.slane %v106, 3
    %v120 = vunpack.c.l.b16 %v102
    %v121 = vunpack.c.h.b16 %v102
    %v122 = vunpack.c.l.b16 %v103
    %v123 = vunpack.c.h.b16 %v103
    %v124 = vunpack.c.l.b16 %v104
    %v125 = vunpack.c.h.b16 %v104
    %v126 = vunpack.c.l.b16 %v105
    %v127 = vunpack.c.h.b16 %v105
    %v128 = vpack.c.b16 %v124, %v120
    %v129 = vpack.c.b16 %v125, %v121
    %v130 = vpack.c.b16 %v126, %v122
    %v131 = vpack.c.b16 %v127, %v123
    %vm136 = vcmask 130048
    %v138 = vsel %vm136, %v101, 0
    %140 = vmatpush.bf16.msra.mxu0 0
    %141 = vmatpush.bf16.msra.mxu0 0
    %142 = vmatpush.bf16.msra.mxu0 0
    %143 = vmatpush.bf16.msra.mxu0 0
    %144 = vmatpush.bf16.msra.mxu0 0
    %145 = vmatpush.bf16.msra.mxu0 0
    %146 = vmatpush.bf16.msra.mxu0 0
    %147 = vmatpush.bf16.msra.mxu0 %v128
    %148 = vmatmul.bf16.gmra.mxu0 %v138
    %v149 = vpop.f32.mrf.mxu0
    %v150 = vadd.f32 %v108, %v149
    %v151 = vpop.f32.mrf.mxu0
    %152 = vdwg.mxu0
    %153 = vmatpush.bf16.msra.mxu0 0
    %154 = vmatpush.bf16.msra.mxu0 0
    %155 = vmatpush.bf16.msra.mxu0 0
    %156 = vmatpush.bf16.msra.mxu0 0
    %157 = vmatpush.bf16.msra.mxu0 0
    %158 = vmatpush.bf16.msra.mxu0 0
    %159 = vmatpush.bf16.msra.mxu0 0
    %160 = vmatpush.bf16.msra.mxu0 %v129
    %161 = vmatmul.bf16.gmra.mxu0 %v138
    %v162 = vpop.f32.mrf.mxu0
    %v163 = vadd.f32 %v109, %v162
    %v164 = vpop.f32.mrf.mxu0
    %165 = vdwg.mxu0
    %166 = vmatpush.bf16.msra.mxu0 0
    %167 = vmatpush.bf16.msra.mxu0 0
    %168 = vmatpush.bf16.msra.mxu0 0
    %169 = vmatpush.bf16.msra.mxu0 0
    %170 = vmatpush.bf16.msra.mxu0 0
    %171 = vmatpush.bf16.msra.mxu0 0
    %172 = vmatpush.bf16.msra.mxu0 0
    %173 = vmatpush.bf16.msra.mxu0 %v130
    %174 = vmatmul.bf16.gmra.mxu0 %v138
    %v175 = vpop.f32.mrf.mxu0
    %v176 = vadd.f32 %v110, %v175
    %v177 = vpop.f32.mrf.mxu0
    %178 = vdwg.mxu0
    %179 = vmatpush.bf16.msra.mxu0 0
    %180 = vmatpush.bf16.msra.mxu0 0
    %181 = vmatpush.bf16.msra.mxu0 0
    %182 = vmatpush.bf16.msra.mxu0 0
    %183 = vmatpush.bf16.msra.mxu0 0
    %184 = vmatpush.bf16.msra.mxu0 0
    %185 = vmatpush.bf16.msra.mxu0 0
    %186 = vmatpush.bf16.msra.mxu0 %v131
    %187 = vmatmul.bf16.gmra.mxu0 %v138
    %v188 = vpop.f32.mrf.mxu0
    %v189 = vadd.f32 %v111, %v188
    %v190 = vpop.f32.mrf.mxu0
    %191 = vdwg.mxu0
    %v192 = vmax.f32 %v150, 0.0
    %v193 = vmax.f32 %v163, 0.0
    %v194 = vmax.f32 %v176, 0.0
    %v195 = vmax.f32 %v189, 0.0
    %v196 = vpack.c.bf16 %v192, %v192
    %v197 = vpack.c.bf16 %v193, %v193
    %v198 = vpack.c.bf16 %v194, %v194
    %v199 = vpack.c.bf16 %v195, %v195
    %v200 = vld [vmem:[#allocation8] sm:$0xff]
    %v201 = vld [vmem:[#allocation8 + $0x8] sm:$0xff]
    %v202 = vld [vmem:[#allocation8 + $0x10] sm:$0xff]
    %v203 = vld [vmem:[#allocation8 + $0x18] sm:$0xff]
    %v204 = vld [vmem:[#allocation8 + $0x20] sm:$0xff]
    %v205 = vld [vmem:[#allocation8 + $0x28] sm:$0xff]
    %v206 = vld [vmem:[#allocation8 + $0x30] sm:$0xff]
    %v207 = vld [vmem:[#allocation8 + $0x38] sm:$0xff]
    %v208 = vld [vmem:[#allocation8 + $0x40] sm:$0xff]
    %v209 = vld [vmem:[#allocation8 + $0x48] sm:$0xff]
    %v210 = vld [vmem:[#allocation8 + $0x50] sm:$0xff]
    %v211 = vld [vmem:[#allocation8 + $0x58] sm:$0xff]
    %v212 = vld [vmem:[#allocation8 + $0x60] sm:$0xff]
    %v213 = vld [vmem:[#allocation8 + $0x68] sm:$0xff]
    %v214 = vld [vmem:[#allocation8 + $0x70] sm:$0xff]
    %v215 = vld [vmem:[#allocation8 + $0x78] sm:$0xff]
    %v216 = vld [vmem:[#allocation8 + $0x80] sm:$0xff]
    %v217 = vld [vmem:[#allocation8 + $0x88] sm:$0xff]
    %v218 = vld [vmem:[#allocation8 + $0x90] sm:$0xff]
    %v219 = vld [vmem:[#allocation8 + $0x98] sm:$0xff]
    %v220 = vld [vmem:[#allocation8 + $0xa0] sm:$0xff]
    %v221 = vld [vmem:[#allocation8 + $0xa8] sm:$0xff]
    %v222 = vld [vmem:[#allocation8 + $0xb0] sm:$0xff]
    %v223 = vld [vmem:[#allocation8 + $0xb8] sm:$0xff]
    %v224 = vld [vmem:[#allocation8 + $0xc0] sm:$0xff]
    %v225 = vld [vmem:[#allocation8 + $0xc8] sm:$0xff]
    %v226 = vld [vmem:[#allocation8 + $0xd0] sm:$0xff]
    %v227 = vld [vmem:[#allocation8 + $0xd8] sm:$0xff]
    %v228 = vld [vmem:[#allocation8 + $0xe0] sm:$0xff]
    %v229 = vld [vmem:[#allocation8 + $0xe8] sm:$0xff]
    %v230 = vld [vmem:[#allocation8 + $0xf0] sm:$0xff]
    %v231 = vld [vmem:[#allocation8 + $0xf8] sm:$0xff]
    %v232 = vld [vmem:[#allocation8 + $0x100] sm:$0xff]
    %v233 = vld [vmem:[#allocation8 + $0x108] sm:$0xff]
    %v234 = vld [vmem:[#allocation8 + $0x110] sm:$0xff]
    %v235 = vld [vmem:[#allocation8 + $0x118] sm:$0xff]
    %v236 = vld [vmem:[#allocation8 + $0x120] sm:$0xff]
    %v237 = vld [vmem:[#allocation8 + $0x128] sm:$0xff]
    %v238 = vld [vmem:[#allocation8 + $0x130] sm:$0xff]
    %v239 = vld [vmem:[#allocation8 + $0x138] sm:$0xff]
    %v240 = vld [vmem:[#allocation8 + $0x140] sm:$0xff]
    %v241 = vld [vmem:[#allocation8 + $0x148] sm:$0xff]
    %v242 = vld [vmem:[#allocation8 + $0x150] sm:$0xff]
    %v243 = vld [vmem:[#allocation8 + $0x158] sm:$0xff]
    %v244 = vld [vmem:[#allocation8 + $0x160] sm:$0xff]
    %v245 = vld [vmem:[#allocation8 + $0x168] sm:$0xff]
    %v246 = vld [vmem:[#allocation8 + $0x170] sm:$0xff]
    %v247 = vld [vmem:[#allocation8 + $0x178] sm:$0xff]
    %v248 = vld [vmem:[#allocation8 + $0x180] sm:$0xff]
    %v249 = vld [vmem:[#allocation8 + $0x188] sm:$0xff]
    %v250 = vld [vmem:[#allocation8 + $0x190] sm:$0xff]
    %v251 = vld [vmem:[#allocation8 + $0x198] sm:$0xff]
    %v252 = vld [vmem:[#allocation8 + $0x1a0] sm:$0xff]
    %v253 = vld [vmem:[#allocation8 + $0x1a8] sm:$0xff]
    %v254 = vld [vmem:[#allocation8 + $0x1b0] sm:$0xff]
    %v255 = vld [vmem:[#allocation8 + $0x1b8] sm:$0xff]
    %v256 = vld [vmem:[#allocation8 + $0x1c0] sm:$0xff]
    %v257 = vld [vmem:[#allocation8 + $0x1c8] sm:$0xff]
    %v258 = vld [vmem:[#allocation8 + $0x1d0] sm:$0xff]
    %v259 = vld [vmem:[#allocation8 + $0x1d8] sm:$0xff]
    %v260 = vld [vmem:[#allocation8 + $0x1e0] sm:$0xff]
    %v261 = vld [vmem:[#allocation8 + $0x1e8] sm:$0xff]
    %v262 = vld [vmem:[#allocation8 + $0x1f0] sm:$0xff]
    %v263 = vld [vmem:[#allocation8 + $0x1f8] sm:$0xff]
    %v264 = vld [vmem:[#allocation8 + $0x200] sm:$0xff]
    %v265 = vld [vmem:[#allocation8 + $0x208] sm:$0xff]
    %v266 = vld [vmem:[#allocation8 + $0x210] sm:$0xff]
    %v267 = vld [vmem:[#allocation8 + $0x218] sm:$0xff]
    %v268 = vld [vmem:[#allocation8 + $0x220] sm:$0xff]
    %v269 = vld [vmem:[#allocation8 + $0x228] sm:$0xff]
    %v270 = vld [vmem:[#allocation8 + $0x230] sm:$0xff]
    %v271 = vld [vmem:[#allocation8 + $0x238] sm:$0xff]
    %v272 = vld [vmem:[#allocation8 + $0x240] sm:$0xff]
    %v273 = vld [vmem:[#allocation8 + $0x248] sm:$0xff]
    %v274 = vld [vmem:[#allocation8 + $0x250] sm:$0xff]
    %v275 = vld [vmem:[#allocation8 + $0x258] sm:$0xff]
    %v276 = vld [vmem:[#allocation8 + $0x260] sm:$0xff]
    %v277 = vld [vmem:[#allocation8 + $0x268] sm:$0xff]
    %v278 = vld [vmem:[#allocation8 + $0x270] sm:$0xff]
    %v279 = vld [vmem:[#allocation8 + $0x278] sm:$0xff]
    %v280 = vld [vmem:[#allocation8 + $0x280] sm:$0xff]
    %v281 = vld [vmem:[#allocation8 + $0x288] sm:$0xff]
    %v282 = vld [vmem:[#allocation8 + $0x290] sm:$0xff]
    %v283 = vld [vmem:[#allocation8 + $0x298] sm:$0xff]
    %v284 = vld [vmem:[#allocation8 + $0x2a0] sm:$0xff]
    %v285 = vld [vmem:[#allocation8 + $0x2a8] sm:$0xff]
    %v286 = vld [vmem:[#allocation8 + $0x2b0] sm:$0xff]
    %v287 = vld [vmem:[#allocation8 + $0x2b8] sm:$0xff]
    %v288 = vld [vmem:[#allocation8 + $0x2c0] sm:$0xff]
    %v289 = vld [vmem:[#allocation8 + $0x2c8] sm:$0xff]
    %v290 = vld [vmem:[#allocation8 + $0x2d0] sm:$0xff]
    %v291 = vld [vmem:[#allocation8 + $0x2d8] sm:$0xff]
    %v292 = vld [vmem:[#allocation8 + $0x2e0] sm:$0xff]
    %v293 = vld [vmem:[#allocation8 + $0x2e8] sm:$0xff]
    %v294 = vld [vmem:[#allocation8 + $0x2f0] sm:$0xff]
    %v295 = vld [vmem:[#allocation8 + $0x2f8] sm:$0xff]
    %v296 = vld [vmem:[#allocation8 + $0x300] sm:$0xff]
    %v297 = vld [vmem:[#allocation8 + $0x308] sm:$0xff]
    %v298 = vld [vmem:[#allocation8 + $0x310] sm:$0xff]
    %v299 = vld [vmem:[#allocation8 + $0x318] sm:$0xff]
    %v300 = vld [vmem:[#allocation8 + $0x320] sm:$0xff]
    %v301 = vld [vmem:[#allocation8 + $0x328] sm:$0xff]
    %v302 = vld [vmem:[#allocation8 + $0x330] sm:$0xff]
    %v303 = vld [vmem:[#allocation8 + $0x338] sm:$0xff]
    %v304 = vld [vmem:[#allocation8 + $0x340] sm:$0xff]
    %v305 = vld [vmem:[#allocation8 + $0x348] sm:$0xff]
    %v306 = vld [vmem:[#allocation8 + $0x350] sm:$0xff]
    %v307 = vld [vmem:[#allocation8 + $0x358] sm:$0xff]
    %v308 = vld [vmem:[#allocation8 + $0x360] sm:$0xff]
    %v309 = vld [vmem:[#allocation8 + $0x368] sm:$0xff]
    %v310 = vld [vmem:[#allocation8 + $0x370] sm:$0xff]
    %v311 = vld [vmem:[#allocation8 + $0x378] sm:$0xff]
    %v312 = vld [vmem:[#allocation8 + $0x380] sm:$0xff]
    %v313 = vld [vmem:[#allocation8 + $0x388] sm:$0xff]
    %v314 = vld [vmem:[#allocation8 + $0x390] sm:$0xff]
    %v315 = vld [vmem:[#allocation8 + $0x398] sm:$0xff]
    %v316 = vld [vmem:[#allocation8 + $0x3a0] sm:$0xff]
    %v317 = vld [vmem:[#allocation8 + $0x3a8] sm:$0xff]
    %v318 = vld [vmem:[#allocation8 + $0x3b0] sm:$0xff]
    %v319 = vld [vmem:[#allocation8 + $0x3b8] sm:$0xff]
    %v320 = vld [vmem:[#allocation8 + $0x3c0] sm:$0xff]
    %v321 = vld [vmem:[#allocation8 + $0x3c8] sm:$0xff]
    %v322 = vld [vmem:[#allocation8 + $0x3d0] sm:$0xff]
    %v323 = vld [vmem:[#allocation8 + $0x3d8] sm:$0xff]
    %v324 = vld [vmem:[#allocation8 + $0x3e0] sm:$0xff]
    %v325 = vld [vmem:[#allocation8 + $0x3e8] sm:$0xff]
    %v326 = vld [vmem:[#allocation8 + $0x3f0] sm:$0xff]
    %v327 = vld [vmem:[#allocation8 + $0x3f8] sm:$0xff]
    %v328 = vld [vmem:[%s4] sm:$0xf]
    %v330 = vperm.slane %v328, 0
    %v331 = vperm.slane %v328, 1
    %v332 = vperm.slane %v328, 2
    %v333 = vperm.slane %v328, 3
    %v466 = vunpack.c.l.b16 %v200
    %v467 = vunpack.c.h.b16 %v200
    %v468 = vunpack.c.l.b16 %v201
    %v469 = vunpack.c.h.b16 %v201
    %v470 = vunpack.c.l.b16 %v202
    %v471 = vunpack.c.h.b16 %v202
    %v472 = vunpack.c.l.b16 %v203
    %v473 = vunpack.c.h.b16 %v203
    %v474 = vunpack.c.l.b16 %v204
    %v475 = vunpack.c.h.b16 %v204
    %v476 = vunpack.c.l.b16 %v205
    %v477 = vunpack.c.h.b16 %v205
    %v478 = vunpack.c.l.b16 %v206
    %v479 = vunpack.c.h.b16 %v206
    %v480 = vunpack.c.l.b16 %v207
    %v481 = vunpack.c.h.b16 %v207
    %v482 = vunpack.c.l.b16 %v208
    %v483 = vunpack.c.h.b16 %v208
    %v484 = vunpack.c.l.b16 %v209
    %v485 = vunpack.c.h.b16 %v209
    %v486 = vunpack.c.l.b16 %v210
    %v487 = vunpack.c.h.b16 %v210
    %v488 = vunpack.c.l.b16 %v211
    %v489 = vunpack.c.h.b16 %v211
    %v490 = vunpack.c.l.b16 %v212
    %v491 = vunpack.c.h.b16 %v212
    %v492 = vunpack.c.l.b16 %v213
    %v493 = vunpack.c.h.b16 %v213
    %v494 = vunpack.c.l.b16 %v214
    %v495 = vunpack.c.h.b16 %v214
    %v496 = vunpack.c.l.b16 %v215
    %v497 = vunpack.c.h.b16 %v215
    %v498 = vunpack.c.l.b16 %v216
    %v499 = vunpack.c.h.b16 %v216
    %v500 = vunpack.c.l.b16 %v217
    %v501 = vunpack.c.h.b16 %v217
    %v502 = vunpack.c.l.b16 %v218
    %v503 = vunpack.c.h.b16 %v218
    %v504 = vunpack.c.l.b16 %v219
    %v505 = vunpack.c.h.b16 %v219
    %v506 = vunpack.c.l.b16 %v220
    %v507 = vunpack.c.h.b16 %v220
    %v508 = vunpack.c.l.b16 %v221
    %v509 = vunpack.c.h.b16 %v221
    %v510 = vunpack.c.l.b16 %v222
    %v511 = vunpack.c.h.b16 %v222
    %v512 = vunpack.c.l.b16 %v223
    %v513 = vunpack.c.h.b16 %v223
    %v514 = vunpack.c.l.b16 %v224
    %v515 = vunpack.c.h.b16 %v224
    %v516 = vunpack.c.l.b16 %v225
    %v517 = vunpack.c.h.b16 %v225
    %v518 = vunpack.c.l.b16 %v226
    %v519 = vunpack.c.h.b16 %v226
    %v520 = vunpack.c.l.b16 %v227
    %v521 = vunpack.c.h.b16 %v227
    %v522 = vunpack.c.l.b16 %v228
    %v523 = vunpack.c.h.b16 %v228
    %v524 = vunpack.c.l.b16 %v229
    %v525 = vunpack.c.h.b16 %v229
    %v526 = vunpack.c.l.b16 %v230
    %v527 = vunpack.c.h.b16 %v230
    %v528 = vunpack.c.l.b16 %v231
    %v529 = vunpack.c.h.b16 %v231
    %v530 = vunpack.c.l.b16 %v232
    %v531 = vunpack.c.h.b16 %v232
    %v532 = vunpack.c.l.b16 %v233
    %v533 = vunpack.c.h.b16 %v233
    %v534 = vunpack.c.l.b16 %v234
    %v535 = vunpack.c.h.b16 %v234
    %v536 = vunpack.c.l.b16 %v235
    %v537 = vunpack.c.h.b16 %v235
    %v538 = vunpack.c.l.b16 %v236
    %v539 = vunpack.c.h.b16 %v236
    %v540 = vunpack.c.l.b16 %v237
    %v541 = vunpack.c.h.b16 %v237
    %v542 = vunpack.c.l.b16 %v238
    %v543 = vunpack.c.h.b16 %v238
    %v544 = vunpack.c.l.b16 %v239
    %v545 = vunpack.c.h.b16 %v239
    %v546 = vunpack.c.l.b16 %v240
    %v547 = vunpack.c.h.b16 %v240
    %v548 = vunpack.c.l.b16 %v241
    %v549 = vunpack.c.h.b16 %v241
    %v550 = vunpack.c.l.b16 %v242
    %v551 = vunpack.c.h.b16 %v242
    %v552 = vunpack.c.l.b16 %v243
    %v553 = vunpack.c.h.b16 %v243
    %v554 = vunpack.c.l.b16 %v244
    %v555 = vunpack.c.h.b16 %v244
    %v556 = vunpack.c.l.b16 %v245
    %v557 = vunpack.c.h.b16 %v245
    %v558 = vunpack.c.l.b16 %v246
    %v559 = vunpack.c.h.b16 %v246
    %v560 = vunpack.c.l.b16 %v247
    %v561 = vunpack.c.h.b16 %v247
    %v562 = vunpack.c.l.b16 %v248
    %v563 = vunpack.c.h.b16 %v248
    %v564 = vunpack.c.l.b16 %v249
    %v565 = vunpack.c.h.b16 %v249
    %v566 = vunpack.c.l.b16 %v250
    %v567 = vunpack.c.h.b16 %v250
    %v568 = vunpack.c.l.b16 %v251
    %v569 = vunpack.c.h.b16 %v251
    %v570 = vunpack.c.l.b16 %v252
    %v571 = vunpack.c.h.b16 %v252
    %v572 = vunpack.c.l.b16 %v253
    %v573 = vunpack.c.h.b16 %v253
    %v574 = vunpack.c.l.b16 %v254
    %v575 = vunpack.c.h.b16 %v254
    %v576 = vunpack.c.l.b16 %v255
    %v577 = vunpack.c.h.b16 %v255
    %v578 = vunpack.c.l.b16 %v256
    %v579 = vunpack.c.h.b16 %v256
    %v580 = vunpack.c.l.b16 %v257
    %v581 = vunpack.c.h.b16 %v257
    %v582 = vunpack.c.l.b16 %v258
    %v583 = vunpack.c.h.b16 %v258
    %v584 = vunpack.c.l.b16 %v259
    %v585 = vunpack.c.h.b16 %v259
    %v586 = vunpack.c.l.b16 %v260
    %v587 = vunpack.c.h.b16 %v260
    %v588 = vunpack.c.l.b16 %v261
    %v589 = vunpack.c.h.b16 %v261
    %v590 = vunpack.c.l.b16 %v262
    %v591 = vunpack.c.h.b16 %v262
    %v592 = vunpack.c.l.b16 %v263
    %v593 = vunpack.c.h.b16 %v263
    %v594 = vunpack.c.l.b16 %v264
    %v595 = vunpack.c.h.b16 %v264
    %v596 = vunpack.c.l.b16 %v265
    %v597 = vunpack.c.h.b16 %v265
    %v598 = vunpack.c.l.b16 %v266
    %v599 = vunpack.c.h.b16 %v266
    %v600 = vunpack.c.l.b16 %v267
    %v601 = vunpack.c.h.b16 %v267
    %v602 = vunpack.c.l.b16 %v268
    %v603 = vunpack.c.h.b16 %v268
    %v604 = vunpack.c.l.b16 %v269
    %v605 = vunpack.c.h.b16 %v269
    %v606 = vunpack.c.l.b16 %v270
    %v607 = vunpack.c.h.b16 %v270
    %v608 = vunpack.c.l.b16 %v271
    %v609 = vunpack.c.h.b16 %v271
    %v610 = vunpack.c.l.b16 %v272
    %v611 = vunpack.c.h.b16 %v272
    %v612 = vunpack.c.l.b16 %v273
    %v613 = vunpack.c.h.b16 %v273
    %v614 = vunpack.c.l.b16 %v274
    %v615 = vunpack.c.h.b16 %v274
    %v616 = vunpack.c.l.b16 %v275
    %v617 = vunpack.c.h.b16 %v275
    %v618 = vunpack.c.l.b16 %v276
    %v619 = vunpack.c.h.b16 %v276
    %v620 = vunpack.c.l.b16 %v277
    %v621 = vunpack.c.h.b16 %v277
    %v622 = vunpack.c.l.b16 %v278
    %v623 = vunpack.c.h.b16 %v278
    %v624 = vunpack.c.l.b16 %v279
    %v625 = vunpack.c.h.b16 %v279
    %v626 = vunpack.c.l.b16 %v280
    %v627 = vunpack.c.h.b16 %v280
    %v628 = vunpack.c.l.b16 %v281
    %v629 = vunpack.c.h.b16 %v281
    %v630 = vunpack.c.l.b16 %v282
    %v631 = vunpack.c.h.b16 %v282
    %v632 = vunpack.c.l.b16 %v283
    %v633 = vunpack.c.h.b16 %v283
    %v634 = vunpack.c.l.b16 %v284
    %v635 = vunpack.c.h.b16 %v284
    %v636 = vunpack.c.l.b16 %v285
    %v637 = vunpack.c.h.b16 %v285
    %v638 = vunpack.c.l.b16 %v286
    %v639 = vunpack.c.h.b16 %v286
    %v640 = vunpack.c.l.b16 %v287
    %v641 = vunpack.c.h.b16 %v287
    %v642 = vunpack.c.l.b16 %v288
    %v643 = vunpack.c.h.b16 %v288
    %v644 = vunpack.c.l.b16 %v289
    %v645 = vunpack.c.h.b16 %v289
    %v646 = vunpack.c.l.b16 %v290
    %v647 = vunpack.c.h.b16 %v290
    %v648 = vunpack.c.l.b16 %v291
    %v649 = vunpack.c.h.b16 %v291
    %v650 = vunpack.c.l.b16 %v292
    %v651 = vunpack.c.h.b16 %v292
    %v652 = vunpack.c.l.b16 %v293
    %v653 = vunpack.c.h.b16 %v293
    %v654 = vunpack.c.l.b16 %v294
    %v655 = vunpack.c.h.b16 %v294
    %v656 = vunpack.c.l.b16 %v295
    %v657 = vunpack.c.h.b16 %v295
    %v658 = vunpack.c.l.b16 %v296
    %v659 = vunpack.c.h.b16 %v296
    %v660 = vunpack.c.l.b16 %v297
    %v661 = vunpack.c.h.b16 %v297
    %v662 = vunpack.c.l.b16 %v298
    %v663 = vunpack.c.h.b16 %v298
    %v664 = vunpack.c.l.b16 %v299
    %v665 = vunpack.c.h.b16 %v299
    %v666 = vunpack.c.l.b16 %v300
    %v667 = vunpack.c.h.b16 %v300
    %v668 = vunpack.c.l.b16 %v301
    %v669 = vunpack.c.h.b16 %v301
    %v670 = vunpack.c.l.b16 %v302
    %v671 = vunpack.c.h.b16 %v302
    %v672 = vunpack.c.l.b16 %v303
    %v673 = vunpack.c.h.b16 %v303
    %v674 = vunpack.c.l.b16 %v304
    %v675 = vunpack.c.h.b16 %v304
    %v676 = vunpack.c.l.b16 %v305
    %v677 = vunpack.c.h.b16 %v305
    %v678 = vunpack.c.l.b16 %v306
    %v679 = vunpack.c.h.b16 %v306
    %v680 = vunpack.c.l.b16 %v307
    %v681 = vunpack.c.h.b16 %v307
    %v682 = vunpack.c.l.b16 %v308
    %v683 = vunpack.c.h.b16 %v308
    %v684 = vunpack.c.l.b16 %v309
    %v685 = vunpack.c.h.b16 %v309
    %v686 = vunpack.c.l.b16 %v310
    %v687 = vunpack.c.h.b16 %v310
    %v688 = vunpack.c.l.b16 %v311
    %v689 = vunpack.c.h.b16 %v311
    %v690 = vunpack.c.l.b16 %v312
    %v691 = vunpack.c.h.b16 %v312
    %v692 = vunpack.c.l.b16 %v313
    %v693 = vunpack.c.h.b16 %v313
    %v694 = vunpack.c.l.b16 %v314
    %v695 = vunpack.c.h.b16 %v314
    %v696 = vunpack.c.l.b16 %v315
    %v697 = vunpack.c.h.b16 %v315
    %v698 = vunpack.c.l.b16 %v316
    %v699 = vunpack.c.h.b16 %v316
    %v700 = vunpack.c.l.b16 %v317
    %v701 = vunpack.c.h.b16 %v317
    %v702 = vunpack.c.l.b16 %v318
    %v703 = vunpack.c.h.b16 %v318
    %v704 = vunpack.c.l.b16 %v319
    %v705 = vunpack.c.h.b16 %v319
    %v706 = vunpack.c.l.b16 %v320
    %v707 = vunpack.c.h.b16 %v320
    %v708 = vunpack.c.l.b16 %v321
    %v709 = vunpack.c.h.b16 %v321
    %v710 = vunpack.c.l.b16 %v322
    %v711 = vunpack.c.h.b16 %v322
    %v712 = vunpack.c.l.b16 %v323
    %v713 = vunpack.c.h.b16 %v323
    %v714 = vunpack.c.l.b16 %v324
    %v715 = vunpack.c.h.b16 %v324
    %v716 = vunpack.c.l.b16 %v325
    %v717 = vunpack.c.h.b16 %v325
    %v718 = vunpack.c.l.b16 %v326
    %v719 = vunpack.c.h.b16 %v326
    %v720 = vunpack.c.l.b16 %v327
    %v721 = vunpack.c.h.b16 %v327
    %v722 = vpack.c.b16 %v470, %v466
    %v723 = vpack.c.b16 %v471, %v467
    %v724 = vpack.c.b16 %v472, %v468
    %v725 = vpack.c.b16 %v473, %v469
    %v726 = vpack.c.b16 %v478, %v474
    %v727 = vpack.c.b16 %v479, %v475
    %v728 = vpack.c.b16 %v480, %v476
    %v729 = vpack.c.b16 %v481, %v477
    %v730 = vpack.c.b16 %v486, %v482
    %v731 = vpack.c.b16 %v487, %v483
    %v732 = vpack.c.b16 %v488, %v484
    %v733 = vpack.c.b16 %v489, %v485
    %v734 = vpack.c.b16 %v494, %v490
    %v735 = vpack.c.b16 %v495, %v491
    %v736 = vpack.c.b16 %v496, %v492
    %v737 = vpack.c.b16 %v497, %v493
    %v738 = vpack.c.b16 %v502, %v498
    %v739 = vpack.c.b16 %v503, %v499
    %v740 = vpack.c.b16 %v504, %v500
    %v741 = vpack.c.b16 %v505, %v501
    %v742 = vpack.c.b16 %v510, %v506
    %v743 = vpack.c.b16 %v511, %v507
    %v744 = vpack.c.b16 %v512, %v508
    %v745 = vpack.c.b16 %v513, %v509
    %v746 = vpack.c.b16 %v518, %v514
    %v747 = vpack.c.b16 %v519, %v515
    %v748 = vpack.c.b16 %v520, %v516
    %v749 = vpack.c.b16 %v521, %v517
    %v750 = vpack.c.b16 %v526, %v522
    %v751 = vpack.c.b16 %v527, %v523
    %v752 = vpack.c.b16 %v528, %v524
    %v753 = vpack.c.b16 %v529, %v525
    %v754 = vpack.c.b16 %v534, %v530
    %v755 = vpack.c.b16 %v535, %v531
    %v756 = vpack.c.b16 %v536, %v532
    %v757 = vpack.c.b16 %v537, %v533
    %v758 = vpack.c.b16 %v542, %v538
    %v759 = vpack.c.b16 %v543, %v539
    %v760 = vpack.c.b16 %v544, %v540
    %v761 = vpack.c.b16 %v545, %v541
    %v762 = vpack.c.b16 %v550, %v546
    %v763 = vpack.c.b16 %v551, %v547
    %v764 = vpack.c.b16 %v552, %v548
    %v765 = vpack.c.b16 %v553, %v549
    %v766 = vpack.c.b16 %v558, %v554
    %v767 = vpack.c.b16 %v559, %v555
    %v768 = vpack.c.b16 %v560, %v556
    %v769 = vpack.c.b16 %v561, %v557
    %v770 = vpack.c.b16 %v566, %v562
    %v771 = vpack.c.b16 %v567, %v563
    %v772 = vpack.c.b16 %v568, %v564
    %v773 = vpack.c.b16 %v569, %v565
    %v774 = vpack.c.b16 %v574, %v570
    %v775 = vpack.c.b16 %v575, %v571
    %v776 = vpack.c.b16 %v576, %v572
    %v777 = vpack.c.b16 %v577, %v573
    %v778 = vpack.c.b16 %v582, %v578
    %v779 = vpack.c.b16 %v583, %v579
    %v780 = vpack.c.b16 %v584, %v580
    %v781 = vpack.c.b16 %v585, %v581
    %v782 = vpack.c.b16 %v590, %v586
    %v783 = vpack.c.b16 %v591, %v587
    %v784 = vpack.c.b16 %v592, %v588
    %v785 = vpack.c.b16 %v593, %v589
    %v786 = vpack.c.b16 %v598, %v594
    %v787 = vpack.c.b16 %v599, %v595
    %v788 = vpack.c.b16 %v600, %v596
    %v789 = vpack.c.b16 %v601, %v597
    %v790 = vpack.c.b16 %v606, %v602
    %v791 = vpack.c.b16 %v607, %v603
    %v792 = vpack.c.b16 %v608, %v604
    %v793 = vpack.c.b16 %v609, %v605
    %v794 = vpack.c.b16 %v614, %v610
    %v795 = vpack.c.b16 %v615, %v611
    %v796 = vpack.c.b16 %v616, %v612
    %v797 = vpack.c.b16 %v617, %v613
    %v798 = vpack.c.b16 %v622, %v618
    %v799 = vpack.c.b16 %v623, %v619
    %v800 = vpack.c.b16 %v624, %v620
    %v801 = vpack.c.b16 %v625, %v621
    %v802 = vpack.c.b16 %v630, %v626
    %v803 = vpack.c.b16 %v631, %v627
    %v804 = vpack.c.b16 %v632, %v628
    %v805 = vpack.c.b16 %v633, %v629
    %v806 = vpack.c.b16 %v638, %v634
    %v807 = vpack.c.b16 %v639, %v635
    %v808 = vpack.c.b16 %v640, %v636
    %v809 = vpack.c.b16 %v641, %v637
    %v810 = vpack.c.b16 %v646, %v642
    %v811 = vpack.c.b16 %v647, %v643
    %v812 = vpack.c.b16 %v648, %v644
    %v813 = vpack.c.b16 %v649, %v645
    %v814 = vpack.c.b16 %v654, %v650
    %v815 = vpack.c.b16 %v655, %v651
    %v816 = vpack.c.b16 %v656, %v652
    %v817 = vpack.c.b16 %v657, %v653
    %v818 = vpack.c.b16 %v662, %v658
    %v819 = vpack.c.b16 %v663, %v659
    %v820 = vpack.c.b16 %v664, %v660
    %v821 = vpack.c.b16 %v665, %v661
    %v822 = vpack.c.b16 %v670, %v666
    %v823 = vpack.c.b16 %v671, %v667
    %v824 = vpack.c.b16 %v672, %v668
    %v825 = vpack.c.b16 %v673, %v669
    %v826 = vpack.c.b16 %v678, %v674
    %v827 = vpack.c.b16 %v679, %v675
    %v828 = vpack.c.b16 %v680, %v676
    %v829 = vpack.c.b16 %v681, %v677
    %v830 = vpack.c.b16 %v686, %v682
    %v831 = vpack.c.b16 %v687, %v683
    %v832 = vpack.c.b16 %v688, %v684
    %v833 = vpack.c.b16 %v689, %v685
    %v834 = vpack.c.b16 %v694, %v690
    %v835 = vpack.c.b16 %v695, %v691
    %v836 = vpack.c.b16 %v696, %v692
    %v837 = vpack.c.b16 %v697, %v693
    %v838 = vpack.c.b16 %v702, %v698
    %v839 = vpack.c.b16 %v703, %v699
    %v840 = vpack.c.b16 %v704, %v700
    %v841 = vpack.c.b16 %v705, %v701
    %v842 = vpack.c.b16 %v710, %v706
    %v843 = vpack.c.b16 %v711, %v707
    %v844 = vpack.c.b16 %v712, %v708
    %v845 = vpack.c.b16 %v713, %v709
    %v846 = vpack.c.b16 %v718, %v714
    %v847 = vpack.c.b16 %v719, %v715
    %v848 = vpack.c.b16 %v720, %v716
    %v849 = vpack.c.b16 %v721, %v717
    %978 = vmatpush.bf16.msra.mxu0 %v750
    %979 = vmatpush.bf16.msra.mxu0 %v746
    %980 = vmatpush.bf16.msra.mxu0 %v742
    %981 = vmatpush.bf16.msra.mxu0 %v738
    %982 = vmatpush.bf16.msra.mxu0 %v734
    %983 = vmatpush.bf16.msra.mxu0 %v730
    %984 = vmatpush.bf16.msra.mxu0 %v726
    %985 = vmatpush.bf16.msra.mxu0 %v722
    %986 = vmatmul.bf16.gmra.mxu0 %v196
    %v987 = vpop.f32.mrf.mxu0
    %v988 = vadd.f32 %v330, %v987
    %v989 = vpop.f32.mrf.mxu0
    %990 = vdwg.mxu0
    %991 = vmatpush.bf16.msra.mxu0 %v782
    %992 = vmatpush.bf16.msra.mxu0 %v778
    %993 = vmatpush.bf16.msra.mxu0 %v774
    %994 = vmatpush.bf16.msra.mxu0 %v770
    %995 = vmatpush.bf16.msra.mxu0 %v766
    %996 = vmatpush.bf16.msra.mxu0 %v762
    %997 = vmatpush.bf16.msra.mxu0 %v758
    %998 = vmatpush.bf16.msra.mxu0 %v754
    %999 = vmatmul.bf16.gmra.mxu0 %v197
    %v1000 = vpop.f32.mrf.mxu0
    %v1001 = vadd.f32 %v988, %v1000
    %v1002 = vpop.f32.mrf.mxu0
    %1003 = vdwg.mxu0
    %1004 = vmatpush.bf16.msra.mxu0 %v814
    %1005 = vmatpush.bf16.msra.mxu0 %v810
    %1006 = vmatpush.bf16.msra.mxu0 %v806
    %1007 = vmatpush.bf16.msra.mxu0 %v802
    %1008 = vmatpush.bf16.msra.mxu0 %v798
    %1009 = vmatpush.bf16.msra.mxu0 %v794
    %1010 = vmatpush.bf16.msra.mxu0 %v790
    %1011 = vmatpush.bf16.msra.mxu0 %v786
    %1012 = vmatmul.bf16.gmra.mxu0 %v198
    %v1013 = vpop.f32.mrf.mxu0
    %v1014 = vadd.f32 %v1001, %v1013
    %v1015 = vpop.f32.mrf.mxu0
    %1016 = vdwg.mxu0
    %1017 = vmatpush.bf16.msra.mxu0 %v846
    %1018 = vmatpush.bf16.msra.mxu0 %v842
    %1019 = vmatpush.bf16.msra.mxu0 %v838
    %1020 = vmatpush.bf16.msra.mxu0 %v834
    %1021 = vmatpush.bf16.msra.mxu0 %v830
    %1022 = vmatpush.bf16.msra.mxu0 %v826
    %1023 = vmatpush.bf16.msra.mxu0 %v822
    %1024 = vmatpush.bf16.msra.mxu0 %v818
    %1025 = vmatmul.bf16.gmra.mxu0 %v199
    %v1026 = vpop.f32.mrf.mxu0
    %v1027 = vadd.f32 %v1014, %v1026
    %v1028 = vpop.f32.mrf.mxu0
    %1029 = vdwg.mxu0
    %1030 = vmatpush.bf16.msra.mxu0 %v751
    %1031 = vmatpush.bf16.msra.mxu0 %v747
    %1032 = vmatpush.bf16.msra.mxu0 %v743
    %1033 = vmatpush.bf16.msra.mxu0 %v739
    %1034 = vmatpush.bf16.msra.mxu0 %v735
    %1035 = vmatpush.bf16.msra.mxu0 %v731
    %1036 = vmatpush.bf16.msra.mxu0 %v727
    %1037 = vmatpush.bf16.msra.mxu0 %v723
    %1038 = vmatmul.bf16.gmra.mxu0 %v196
    %v1039 = vpop.f32.mrf.mxu0
    %v1040 = vadd.f32 %v331, %v1039
    %v1041 = vpop.f32.mrf.mxu0
    %1042 = vdwg.mxu0
    %1043 = vmatpush.bf16.msra.mxu0 %v783
    %1044 = vmatpush.bf16.msra.mxu0 %v779
    %1045 = vmatpush.bf16.msra.mxu0 %v775
    %1046 = vmatpush.bf16.msra.mxu0 %v771
    %1047 = vmatpush.bf16.msra.mxu0 %v767
    %1048 = vmatpush.bf16.msra.mxu0 %v763
    %1049 = vmatpush.bf16.msra.mxu0 %v759
    %1050 = vmatpush.bf16.msra.mxu0 %v755
    %1051 = vmatmul.bf16.gmra.mxu0 %v197
    %v1052 = vpop.f32.mrf.mxu0
    %v1053 = vadd.f32 %v1040, %v1052
    %v1054 = vpop.f32.mrf.mxu0
    %1055 = vdwg.mxu0
    %1056 = vmatpush.bf16.msra.mxu0 %v815
    %1057 = vmatpush.bf16.msra.mxu0 %v811
    %1058 = vmatpush.bf16.msra.mxu0 %v807
    %1059 = vmatpush.bf16.msra.mxu0 %v803
    %1060 = vmatpush.bf16.msra.mxu0 %v799
    %1061 = vmatpush.bf16.msra.mxu0 %v795
    %1062 = vmatpush.bf16.msra.mxu0 %v791
    %1063 = vmatpush.bf16.msra.mxu0 %v787
    %1064 = vmatmul.bf16.gmra.mxu0 %v198
    %v1065 = vpop.f32.mrf.mxu0
    %v1066 = vadd.f32 %v1053, %v1065
    %v1067 = vpop.f32.mrf.mxu0
    %1068 = vdwg.mxu0
    %1069 = vmatpush.bf16.msra.mxu0 %v847
    %1070 = vmatpush.bf16.msra.mxu0 %v843
    %1071 = vmatpush.bf16.msra.mxu0 %v839
    %1072 = vmatpush.bf16.msra.mxu0 %v835
    %1073 = vmatpush.bf16.msra.mxu0 %v831
    %1074 = vmatpush.bf16.msra.mxu0 %v827
    %1075 = vmatpush.bf16.msra.mxu0 %v823
    %1076 = vmatpush.bf16.msra.mxu0 %v819
    %1077 = vmatmul.bf16.gmra.mxu0 %v199
    %v1078 = vpop.f32.mrf.mxu0
    %v1079 = vadd.f32 %v1066, %v1078
    %v1080 = vpop.f32.mrf.mxu0
    %1081 = vdwg.mxu0
    %1082 = vmatpush.bf16.msra.mxu0 %v752
    %1083 = vmatpush.bf16.msra.mxu0 %v748
    %1084 = vmatpush.bf16.msra.mxu0 %v744
    %1085 = vmatpush.bf16.msra.mxu0 %v740
    %1086 = vmatpush.bf16.msra.mxu0 %v736
    %1087 = vmatpush.bf16.msra.mxu0 %v732
    %1088 = vmatpush.bf16.msra.mxu0 %v728
    %1089 = vmatpush.bf16.msra.mxu0 %v724
    %1090 = vmatmul.bf16.gmra.mxu0 %v196
    %v1091 = vpop.f32.mrf.mxu0
    %v1092 = vadd.f32 %v332, %v1091
    %v1093 = vpop.f32.mrf.mxu0
    %1094 = vdwg.mxu0
    %1095 = vmatpush.bf16.msra.mxu0 %v784
    %1096 = vmatpush.bf16.msra.mxu0 %v780
    %1097 = vmatpush.bf16.msra.mxu0 %v776
    %1098 = vmatpush.bf16.msra.mxu0 %v772
    %1099 = vmatpush.bf16.msra.mxu0 %v768
    %1100 = vmatpush.bf16.msra.mxu0 %v764
    %1101 = vmatpush.bf16.msra.mxu0 %v760
    %1102 = vmatpush.bf16.msra.mxu0 %v756
    %1103 = vmatmul.bf16.gmra.mxu0 %v197
    %v1104 = vpop.f32.mrf.mxu0
    %v1105 = vadd.f32 %v1092, %v1104
    %v1106 = vpop.f32.mrf.mxu0
    %1107 = vdwg.mxu0
    %1108 = vmatpush.bf16.msra.mxu0 %v816
    %1109 = vmatpush.bf16.msra.mxu0 %v812
    %1110 = vmatpush.bf16.msra.mxu0 %v808
    %1111 = vmatpush.bf16.msra.mxu0 %v804
    %1112 = vmatpush.bf16.msra.mxu0 %v800
    %1113 = vmatpush.bf16.msra.mxu0 %v796
    %1114 = vmatpush.bf16.msra.mxu0 %v792
    %1115 = vmatpush.bf16.msra.mxu0 %v788
    %1116 = vmatmul.bf16.gmra.mxu0 %v198
    %v1117 = vpop.f32.mrf.mxu0
    %v1118 = vadd.f32 %v1105, %v1117
    %v1119 = vpop.f32.mrf.mxu0
    %1120 = vdwg.mxu0
    %1121 = vmatpush.bf16.msra.mxu0 %v848
    %1122 = vmatpush.bf16.msra.mxu0 %v844
    %1123 = vmatpush.bf16.msra.mxu0 %v840
    %1124 = vmatpush.bf16.msra.mxu0 %v836
    %1125 = vmatpush.bf16.msra.mxu0 %v832
    %1126 = vmatpush.bf16.msra.mxu0 %v828
    %1127 = vmatpush.bf16.msra.mxu0 %v824
    %1128 = vmatpush.bf16.msra.mxu0 %v820
    %1129 = vmatmul.bf16.gmra.mxu0 %v199
    %v1130 = vpop.f32.mrf.mxu0
    %v1131 = vadd.f32 %v1118, %v1130
    %v1132 = vpop.f32.mrf.mxu0
    %1133 = vdwg.mxu0
    %1134 = vmatpush.bf16.msra.mxu0 %v753
    %1135 = vmatpush.bf16.msra.mxu0 %v749
    %1136 = vmatpush.bf16.msra.mxu0 %v745
    %1137 = vmatpush.bf16.msra.mxu0 %v741
    %1138 = vmatpush.bf16.msra.mxu0 %v737
    %1139 = vmatpush.bf16.msra.mxu0 %v733
    %1140 = vmatpush.bf16.msra.mxu0 %v729
    %1141 = vmatpush.bf16.msra.mxu0 %v725
    %1142 = vmatmul.bf16.gmra.mxu0 %v196
    %v1143 = vpop.f32.mrf.mxu0
    %v1144 = vadd.f32 %v333, %v1143
    %v1145 = vpop.f32.mrf.mxu0
    %1146 = vdwg.mxu0
    %1147 = vmatpush.bf16.msra.mxu0 %v785
    %1148 = vmatpush.bf16.msra.mxu0 %v781
    %1149 = vmatpush.bf16.msra.mxu0 %v777
    %1150 = vmatpush.bf16.msra.mxu0 %v773
    %1151 = vmatpush.bf16.msra.mxu0 %v769
    %1152 = vmatpush.bf16.msra.mxu0 %v765
    %1153 = vmatpush.bf16.msra.mxu0 %v761
    %1154 = vmatpush.bf16.msra.mxu0 %v757
    %1155 = vmatmul.bf16.gmra.mxu0 %v197
    %v1156 = vpop.f32.mrf.mxu0
    %v1157 = vadd.f32 %v1144, %v1156
    %v1158 = vpop.f32.mrf.mxu0
    %1159 = vdwg.mxu0
    %1160 = vmatpush.bf16.msra.mxu0 %v817
    %1161 = vmatpush.bf16.msra.mxu0 %v813
    %1162 = vmatpush.bf16.msra.mxu0 %v809
    %1163 = vmatpush.bf16.msra.mxu0 %v805
    %1164 = vmatpush.bf16.msra.mxu0 %v801
    %1165 = vmatpush.bf16.msra.mxu0 %v797
    %1166 = vmatpush.bf16.msra.mxu0 %v793
    %1167 = vmatpush.bf16.msra.mxu0 %v789
    %1168 = vmatmul.bf16.gmra.mxu0 %v198
    %v1169 = vpop.f32.mrf.mxu0
    %v1170 = vadd.f32 %v1157, %v1169
    %v1171 = vpop.f32.mrf.mxu0
    %1172 = vdwg.mxu0
    %1173 = vmatpush.bf16.msra.mxu0 %v849
    %1174 = vmatpush.bf16.msra.mxu0 %v845
    %1175 = vmatpush.bf16.msra.mxu0 %v841
    %1176 = vmatpush.bf16.msra.mxu0 %v837
    %1177 = vmatpush.bf16.msra.mxu0 %v833
    %1178 = vmatpush.bf16.msra.mxu0 %v829
    %1179 = vmatpush.bf16.msra.mxu0 %v825
    %1180 = vmatpush.bf16.msra.mxu0 %v821
    %1181 = vmatmul.bf16.gmra.mxu0 %v199
    %v1182 = vpop.f32.mrf.mxu0
    %v1183 = vadd.f32 %v1170, %v1182
    %v1184 = vpop.f32.mrf.mxu0
    %1185 = vdwg.mxu0
    %v1186 = vmax.f32 %v1027, 0.0
    %v1187 = vmax.f32 %v1079, 0.0
    %v1188 = vmax.f32 %v1131, 0.0
    %v1189 = vmax.f32 %v1183, 0.0
    %v1190 = vld [vmem:[#allocation10] sm:$0xf]
    %v1192 = vperm.slane %v1190, 0
    %v1193 = vperm.slane %v1190, 1
    %v1194 = vperm.slane %v1190, 2
    %v1195 = vperm.slane %v1190, 3
    %v1200 = vmul.f32 %v1186, %v1192
    %v1201 = vmul.f32 %v1187, %v1193
    %v1202 = vmul.f32 %v1188, %v1194
    %v1203 = vmul.f32 %v1189, %v1195
    %v1204 = vadd.f32 %v1200, %v1201
    %v1205 = vadd.f32 %v1204, %v1202
    %v1206 = vadd.f32 %v1205, %v1203
    %1207 = vadd.xlane.f32.xlu0 %v1206
    %v1208 = vpop.xlane.xlu0 %1207
    %s1209 = sld [smem:[#allocation2]]
    %v1210 = vstv %s1209
    %v1211 = vadd.f32 %v1208, %v1210
    %vm1212 = vcmask 7168
    %1213 = vst.msk [vmem:[%s7] sm:$0xff] %vm1212, %v1211
    // Predicated region
    $region50: #{tpu_custom_call.1} parent=1 // pred_check
      _
    $region51: #{tpu_custom_call.1} parent=1 // pred_check_branch
      %1215 = sbr.rel (0) target = $region53
    $region52: #{tpu_custom_call.1} parent=1 // pred_region
      _
    $region53: #{tpu_custom_call.1} parent=1 // pred_fallthru
      _
    // Predicated region
    $region54: #{tpu_custom_call.1} parent=1 // pred_check
      _
    $region55: #{tpu_custom_call.1} parent=1 // pred_check_branch
      %1217 = sbr.rel (0) target = $region57
    $region56: #{tpu_custom_call.1} parent=1 // pred_region
      _
    $region57: #{tpu_custom_call.1} parent=1 // pred_fallthru
      _
    %1218 = vsyncpa [#allocation4], 1
    %1219 = vsyncpa [#allocation6], 1
    %1220 = vsyncpa [#allocation9], 1

</llo_original>
